<compile_context>
chip_gen: v7x
topology: tpu7x:2x2x1
jax: 0.10.0
libtpu: 0.0.40
codegen_flags: <defaults>
</compile_context>

<pallas_src>
import jax
import jax.numpy as jnp
from jax.experimental import pallas as pl
from jax.experimental.pallas import tpu as pltpu


def _round_up(n, m):
    return ((n + m - 1) // m) * m


def discriminator_kernel(x_ref, w1_ref, b1_ref, w2_ref, b2_ref, w3_ref, b3_ref,
                         out_ref):
    """One batch tile of the 3-layer MLP.

    x_ref  : (TB, F_pad)    bf16  zero-padded [x | condition | phenotype]
    w1_ref : (F_pad, H_pad) bf16
    w2_ref : (H_pad, H_pad) bf16
    b1/b2  : (1, H_pad)     f32
    w3_ref : (1, H_pad)     f32  (fc3 weight as a row)
    b3_ref : (1, 1)         f32  SMEM scalar
    out_ref: (1, TB)        f32  lane-dense probabilities (batch on the lane axis)
    """
    # fc1: bf16 MXU matmul with f32 accumulation; bias + ReLU in f32 (v5e VPU has no bf16).
    h = jnp.dot(x_ref[...], w1_ref[...], preferred_element_type=jnp.float32)
    h = jnp.maximum(h + b1_ref[...], 0.0)
    # TODO(synk): nn.Dropout(0.3) is identity in eval mode; training-mode dropout would
    # build a keep-mask from pltpu.prng_seed + pltpu.prng_random_bits.

    # fc2
    h = jnp.dot(h.astype(jnp.bfloat16), w2_ref[...],
                preferred_element_type=jnp.float32)
    h = jnp.maximum(h + b2_ref[...], 0.0)

    # fc3 has a single output unit: VPU multiply + XLU lane-reduce instead of an N=1
    # MXU matmul that would waste the MXU width and still pay a full drain.
    logits = jnp.sum(h * w3_ref[...], axis=1, keepdims=True) + b3_ref[0, 0]  # (TB, 1)
    # Sublane->lane relayout (cheap XLU transpose) so sigmoid runs on dense vregs and
    # the store is one unmasked lane-dense vst slab instead of TB/8 masked stores.
    out_ref[...] = jax.nn.sigmoid(jnp.transpose(logits))                     # (1, TB)


def discriminator_forward(x, condition, phenotype, packed, *, block_b=512):
    """Forward pass. Concat + lane padding happen in the wrapper; the kernel only
    sees lane-dense (multiple-of-128) tiles."""
    B = x.shape[0]
    F_pad, H_pad = packed["w1"].shape
    F_in = x.shape[1] + condition.shape[1] + phenotype.shape[1]
    assert F_in <= F_pad

    # ---- batch tiling ------------------------------------------------------------
    block_b = max(128, _round_up(block_b, 128))    # multi-tile blocks stay 128-aligned
    TB = min(block_b, _round_up(B, 16))            # 16: bf16 packs 16 sublanes / vreg
    B_pad = _round_up(B, TB)
    # v7x has 2 TensorCores: keep >= 2 grid steps (when cheap to do so) so the
    # "parallel" batch axis can shard across both cores. TB stays a multiple of 128.
    if B_pad // TB == 1 and TB % 256 == 0:
        TB //= 2

    # ---- build the padded bf16 input slab directly (no f32 concat/pad temps) ------
    xc = jnp.zeros((B_pad, F_pad), jnp.bfloat16)
    xc = jax.lax.dynamic_update_slice(xc, x.astype(jnp.bfloat16), (0, 0))
    xc = jax.lax.dynamic_update_slice(xc, condition.astype(jnp.bfloat16),
                                      (0, x.shape[1]))
    xc = jax.lax.dynamic_update_slice(xc, phenotype.astype(jnp.bfloat16),
                                      (0, x.shape[1] + condition.shape[1]))

    # ---- explicit VMEM budget with headroom (<= v7x's 64 MiB physical) ------------
    est = (2 * (F_pad * H_pad + H_pad * H_pad) * 2     # bf16 weights (x2 worst case)
           + 3 * 8 * H_pad * 4                         # f32 bias / w3 rows (8-sublane pad)
           + 2 * TB * F_pad * 2                        # double-buffered activation tiles
           + 2 * 8 * TB * 4                            # output tiles
           + 2 * TB * H_pad * 4)                       # in-kernel f32 intermediates
    vmem_limit = int(min(64 << 20, max(32 << 20, 2 * est)))

    grid = (B_pad // TB,)
    out_shape = jax.ShapeDtypeStruct((1, B_pad), jnp.float32)

    def run(single_buffer_weights):
        # Constant index_map -> weights stay VMEM-resident; double-buffering them buys
        # nothing, so request a single buffer when supported.
        wkw = ({"pipeline_mode": pl.Buffered(1)} if single_buffer_weights else {})
        const = lambda i: (0, 0)
        return pl.pallas_call(
            discriminator_kernel,
            out_shape=out_shape,
            grid=grid,
            in_specs=[
                pl.BlockSpec((TB, F_pad), lambda i: (i, 0)),           # activations stream
                pl.BlockSpec((F_pad, H_pad), const, **wkw),            # w1 (resident)
                pl.BlockSpec((1, H_pad), const, **wkw),                # b1
                pl.BlockSpec((H_pad, H_pad), const, **wkw),            # w2
                pl.BlockSpec((1, H_pad), const, **wkw),                # b2
                pl.BlockSpec((1, H_pad), const, **wkw),                # w3 row
                pl.BlockSpec(memory_space=pltpu.MemorySpace.SMEM),     # b3 scalar
            ],
            out_specs=pl.BlockSpec((1, TB), lambda i: (0, i)),         # lane-dense store
            compiler_params=pltpu.CompilerParams(
                dimension_semantics=("parallel",),
                vmem_limit_bytes=vmem_limit),
        )(xc, packed["w1"], packed["b1"], packed["w2"], packed["b2"],
          packed["w3"], packed["b3"])

    try:
        out = run(True)
    except Exception:
        # pl.Buffered(1) not accepted on this jax build -> default double-buffering
        # (still correct, just more weight VMEM residency).
        out = run(False)

    return out[0, :B].reshape(B, 1)


def init_params(key, input_size, n_covariates, hidden_size):
    """Logical (unpadded, f32) parameters matching nn.Linear shapes ([in, out])."""
    in1 = input_size + n_covariates
    k1, k2, k3 = jax.random.split(key, 3)
    return {
        "w1": jax.random.normal(k1, (in1, hidden_size), jnp.float32) / jnp.sqrt(in1),
        "b1": jnp.zeros((hidden_size,), jnp.float32),
        "w2": jax.random.normal(k2, (hidden_size, hidden_size), jnp.float32) / jnp.sqrt(hidden_size),
        "b2": jnp.zeros((hidden_size,), jnp.float32),
        "w3": jax.random.normal(k3, (hidden_size, 1), jnp.float32) / jnp.sqrt(hidden_size),
        "b3": jnp.zeros((1,), jnp.float32),
    }


def pack_params(p):
    """Zero-pad params to lane-dense (multiple-of-128) shapes; padded rows/cols
    contribute exactly zero, so the math is unchanged. Matmul weights -> bf16."""
    in1, H = p["w1"].shape
    F_pad = _round_up(in1, 128)
    H_pad = _round_up(H, 128)
    w1 = jnp.zeros((F_pad, H_pad), jnp.float32).at[:in1, :H].set(p["w1"])
    w2 = jnp.zeros((H_pad, H_pad), jnp.float32).at[:H, :H].set(p["w2"])
    b1 = jnp.zeros((1, H_pad), jnp.float32).at[0, :H].set(p["b1"])
    b2 = jnp.zeros((1, H_pad), jnp.float32).at[0, :H].set(p["b2"])
    w3 = jnp.zeros((1, H_pad), jnp.float32).at[0, :H].set(p["w3"][:, 0])
    b3 = p["b3"].reshape(1, 1).astype(jnp.float32)
    return {
        "w1": w1.astype(jnp.bfloat16),
        "b1": b1,
        "w2": w2.astype(jnp.bfloat16),
        "b2": b2,
        "w3": w3,   # stays f32: used on the VPU, not the MXU
        "b3": b3,   # SMEM scalar
    }


if __name__ == "__main__":
    # Small shapes consistent with the module.
    batch = 8
    input_size = 16
    n_cond = 2
    n_pheno = 2
    n_covariates = n_cond + n_pheno
    hidden_size = 32

    key = jax.random.PRNGKey(0)
    kx, kc, kp, kparams = jax.random.split(key, 4)

    x = jax.random.normal(kx, (batch, input_size), jnp.float32)
    condition = jax.random.normal(kc, (batch, n_cond), jnp.float32)
    phenotype = jax.random.normal(kp, (batch, n_pheno), jnp.float32)

    params = init_params(kparams, input_size, n_covariates, hidden_size)
    packed = pack_params(params)

    out = discriminator_forward(x, condition, phenotype, packed)
    out = jax.block_until_ready(out)

    # Pure-f32 JAX reference (dropout is identity in eval mode). The kernel uses
    # bf16 MXU operands with f32 accumulation, so tolerance is slightly relaxed.
    xc = jnp.concatenate([x, condition, phenotype], axis=1)
    h = jnp.maximum(xc @ params["w1"] + params["b1"], 0.0)
    h = jnp.maximum(h @ params["w2"] + params["b2"], 0.0)
    ref = jax.nn.sigmoid(h @ params["w3"] + params["b3"])

    assert out.shape == (batch, 1)
    assert jnp.allclose(out, ref, atol=2e-2, rtol=2e-2), float(jnp.max(jnp.abs(out - ref)))
    print("KERNEL_OK")
</pallas_src>

<mosaic_0001>
module attributes {stable_mosaic.version = 11 : i64} {
  func.func @discriminator_kernel(%arg0: i32, %arg1: memref<16x128xbf16, #tpu.memory_space<vmem>>, %arg2: memref<128x128xbf16, #tpu.memory_space<vmem>>, %arg3: memref<1x128xf32, #tpu.memory_space<vmem>>, %arg4: memref<128x128xbf16, #tpu.memory_space<vmem>>, %arg5: memref<1x128xf32, #tpu.memory_space<vmem>>, %arg6: memref<1x128xf32, #tpu.memory_space<vmem>>, %arg7: memref<1x1xf32, #tpu.memory_space<smem>>, %arg8: memref<1x16xf32, #tpu.memory_space<vmem>>) attributes {dimension_semantics = [#tpu.dimension_semantics<parallel>], iteration_bounds = array<i64: 1>, scalar_prefetch = 0 : i64, scratch_operands = 0 : i64, tpu.core_type = #tpu.core_type<tc>, window_params = [{transform_indices = @transform_0, window_bounds = array<i64: 16, 128>}, {pipeline_mode = #tpu.pipeline_mode<synchronous>, transform_indices = @transform_1, window_bounds = array<i64: 128, 128>}, {pipeline_mode = #tpu.pipeline_mode<synchronous>, transform_indices = @transform_2, window_bounds = array<i64: 1, 128>}, {pipeline_mode = #tpu.pipeline_mode<synchronous>, transform_indices = @transform_3, window_bounds = array<i64: 128, 128>}, {pipeline_mode = #tpu.pipeline_mode<synchronous>, transform_indices = @transform_4, window_bounds = array<i64: 1, 128>}, {pipeline_mode = #tpu.pipeline_mode<synchronous>, transform_indices = @transform_5, window_bounds = array<i64: 1, 128>}, {transform_indices = @transform_6, window_bounds = array<i64: 1, 1>}, {transform_indices = @transform_7, window_bounds = array<i64: 1, 16>}]} {
    %c0 = arith.constant 0 : index
    %c0_0 = arith.constant 0 : index
    %0 = vector.load %arg1[%c0, %c0_0] : memref<16x128xbf16, #tpu.memory_space<vmem>>, vector<16x128xbf16>
    %c0_1 = arith.constant 0 : index
    %c0_2 = arith.constant 0 : index
    %1 = vector.load %arg2[%c0_1, %c0_2] : memref<128x128xbf16, #tpu.memory_space<vmem>>, vector<128x128xbf16>
    %cst = arith.constant dense<0.000000e+00> : vector<16x128xf32>
    %2 = tpu.matmul %0, %1, %cst {dimension_numbers = #tpu.dot_dimension_numbers<[1], [0], [0], [1], [0, 0, 1, 1], [], []>} : vector<16x128xbf16>, vector<128x128xbf16>, vector<16x128xf32> -> vector<16x128xf32>
    %c0_3 = arith.constant 0 : index
    %c0_4 = arith.constant 0 : index
    %3 = vector.load %arg3[%c0_3, %c0_4] : memref<1x128xf32, #tpu.memory_space<vmem>>, vector<1x128xf32>
    %4 = vector.broadcast %3 : vector<1x128xf32> to vector<16x128xf32>
    %5 = arith.addf %2, %4 : vector<16x128xf32>
    %cst_5 = arith.constant 0.000000e+00 : f32
    %6 = vector.broadcast %cst_5 : f32 to vector<16x128xf32>
    %7 = arith.maximumf %5, %6 : vector<16x128xf32>
    %8 = arith.truncf %7 : vector<16x128xf32> to vector<16x128xbf16>
    %c0_6 = arith.constant 0 : index
    %c0_7 = arith.constant 0 : index
    %9 = vector.load %arg4[%c0_6, %c0_7] : memref<128x128xbf16, #tpu.memory_space<vmem>>, vector<128x128xbf16>
    %cst_8 = arith.constant dense<0.000000e+00> : vector<16x128xf32>
    %10 = tpu.matmul %8, %9, %cst_8 {dimension_numbers = #tpu.dot_dimension_numbers<[1], [0], [0], [1], [0, 0, 1, 1], [], []>} : vector<16x128xbf16>, vector<128x128xbf16>, vector<16x128xf32> -> vector<16x128xf32>
    %c0_9 = arith.constant 0 : index
    %c0_10 = arith.constant 0 : index
    %11 = vector.load %arg5[%c0_9, %c0_10] : memref<1x128xf32, #tpu.memory_space<vmem>>, vector<1x128xf32>
    %12 = vector.broadcast %11 : vector<1x128xf32> to vector<16x128xf32>
    %13 = arith.addf %10, %12 : vector<16x128xf32>
    %cst_11 = arith.constant 0.000000e+00 : f32
    %14 = vector.broadcast %cst_11 : f32 to vector<16x128xf32>
    %15 = arith.maximumf %13, %14 : vector<16x128xf32>
    %c0_12 = arith.constant 0 : index
    %c0_13 = arith.constant 0 : index
    %16 = vector.load %arg6[%c0_12, %c0_13] : memref<1x128xf32, #tpu.memory_space<vmem>>, vector<1x128xf32>
    %17 = vector.broadcast %16 : vector<1x128xf32> to vector<16x128xf32>
    %18 = arith.mulf %15, %17 : vector<16x128xf32>
    %cst_14 = arith.constant dense<0.000000e+00> : vector<16xf32>
    %19 = vector.multi_reduction <add>, %18, %cst_14 [1] : vector<16x128xf32> to vector<16xf32>
    %20 = vector.shape_cast %19 : vector<16xf32> to vector<16x1xf32>
    %c0_15 = arith.constant 0 : index
    %c0_16 = arith.constant 0 : index
    %21 = memref.load %arg7[%c0_15, %c0_16] : memref<1x1xf32, #tpu.memory_space<smem>>
    %22 = vector.broadcast %21 : f32 to vector<16x1xf32>
    %23 = arith.addf %20, %22 : vector<16x1xf32>
    %24 = tpu.transpose %23, [1, 0] : vector<16x1xf32> -> vector<1x16xf32>
    %25 = arith.negf %24 : vector<1x16xf32>
    %26 = math.exp %25 : vector<1x16xf32>
    %cst_17 = arith.constant 1.000000e+00 : f32
    %27 = vector.broadcast %cst_17 : f32 to vector<1x16xf32>
    %28 = arith.addf %27, %26 : vector<1x16xf32>
    %29 = arith.divf %27, %28 : vector<1x16xf32>
    %c0_18 = arith.constant 0 : index
    %c0_19 = arith.constant 0 : index
    %30 = vector.load %arg8[%c0_18, %c0_19] : memref<1x16xf32, #tpu.memory_space<vmem>>, vector<1x16xf32>
    tpu.vector_store %arg8[%c0_18, %c0_19], %29 {strides = array<i32>} : memref<1x16xf32, #tpu.memory_space<vmem>>, vector<1x16xf32>,
    return
  }
  func.func @transform_0(%arg0: i32) -> (i32, i32) {
    %c0_i32 = arith.constant 0 : i32
    %c0_i32_0 = arith.constant 0 : i32
    return %arg0, %c0_i32 : i32, i32
  }
  func.func @transform_1(%arg0: i32) -> (i32, i32) {
    %c0_i32 = arith.constant 0 : i32
    %c0_i32_0 = arith.constant 0 : i32
    %c0_i32_1 = arith.constant 0 : i32
    return %c0_i32, %c0_i32_0 : i32, i32
  }
  func.func @transform_2(%arg0: i32) -> (i32, i32) {
    %c0_i32 = arith.constant 0 : i32
    %c0_i32_0 = arith.constant 0 : i32
    %c0_i32_1 = arith.constant 0 : i32
    return %c0_i32, %c0_i32_0 : i32, i32
  }
  func.func @transform_3(%arg0: i32) -> (i32, i32) {
    %c0_i32 = arith.constant 0 : i32
    %c0_i32_0 = arith.constant 0 : i32
    %c0_i32_1 = arith.constant 0 : i32
    return %c0_i32, %c0_i32_0 : i32, i32
  }
  func.func @transform_4(%arg0: i32) -> (i32, i32) {
    %c0_i32 = arith.constant 0 : i32
    %c0_i32_0 = arith.constant 0 : i32
    %c0_i32_1 = arith.constant 0 : i32
    return %c0_i32, %c0_i32_0 : i32, i32
  }
  func.func @transform_5(%arg0: i32) -> (i32, i32) {
    %c0_i32 = arith.constant 0 : i32
    %c0_i32_0 = arith.constant 0 : i32
    %c0_i32_1 = arith.constant 0 : i32
    return %c0_i32, %c0_i32_0 : i32, i32
  }
  func.func @transform_6(%arg0: i32) -> (i32, i32) {
    %c0_i32 = arith.constant 0 : i32
    %c0_i32_0 = arith.constant 0 : i32
    %c0_i32_1 = arith.constant 0 : i32
    return %c0_i32, %c0_i32_0 : i32, i32
  }
  func.func @transform_7(%arg0: i32) -> (i32, i32) {
    %c0_i32 = arith.constant 0 : i32
    %c0_i32_0 = arith.constant 0 : i32
    return %c0_i32, %arg0 : i32, i32
  }
}

module attributes {stable_mosaic.version = 11 : i64} {
  func.func @discriminator_kernel(%arg0: i32, %arg1: memref<16x128xbf16, #tpu.memory_space<vmem>>, %arg2: memref<128x128xbf16, #tpu.memory_space<vmem>>, %arg3: memref<1x128xf32, #tpu.memory_space<vmem>>, %arg4: memref<128x128xbf16, #tpu.memory_space<vmem>>, %arg5: memref<1x128xf32, #tpu.memory_space<vmem>>, %arg6: memref<1x128xf32, #tpu.memory_space<vmem>>, %arg7: memref<1x1xf32, #tpu.memory_space<smem>>, %arg8: memref<1x16xf32, #tpu.memory_space<vmem>>) attributes {dimension_semantics = [#tpu.dimension_semantics<parallel>], iteration_bounds = array<i64: 1>, scalar_prefetch = 0 : i64, scratch_operands = 0 : i64, tpu.core_type = #tpu.core_type<tc>, window_params = [{transform_indices = @transform_0, window_bounds = array<i64: 16, 128>}, {pipeline_mode = #tpu.pipeline_mode<synchronous>, transform_indices = @transform_1, window_bounds = array<i64: 128, 128>}, {pipeline_mode = #tpu.pipeline_mode<synchronous>, transform_indices = @transform_2, window_bounds = array<i64: 1, 128>}, {pipeline_mode = #tpu.pipeline_mode<synchronous>, transform_indices = @transform_3, window_bounds = array<i64: 128, 128>}, {pipeline_mode = #tpu.pipeline_mode<synchronous>, transform_indices = @transform_4, window_bounds = array<i64: 1, 128>}, {pipeline_mode = #tpu.pipeline_mode<synchronous>, transform_indices = @transform_5, window_bounds = array<i64: 1, 128>}, {transform_indices = @transform_6, window_bounds = array<i64: 1, 1>}, {transform_indices = @transform_7, window_bounds = array<i64: 1, 16>}]} {
    %c0 = arith.constant 0 : index
    %c0_0 = arith.constant 0 : index
    %0 = vector.load %arg1[%c0, %c0_0] : memref<16x128xbf16, #tpu.memory_space<vmem>>, vector<16x128xbf16>
    %c0_1 = arith.constant 0 : index
    %c0_2 = arith.constant 0 : index
    %1 = vector.load %arg2[%c0_1, %c0_2] : memref<128x128xbf16, #tpu.memory_space<vmem>>, vector<128x128xbf16>
    %cst = arith.constant dense<0.000000e+00> : vector<16x128xf32>
    %2 = tpu.matmul %0, %1, %cst {dimension_numbers = #tpu.dot_dimension_numbers<[1], [0], [0], [1], [0, 0, 1, 1], [], []>} : vector<16x128xbf16>, vector<128x128xbf16>, vector<16x128xf32> -> vector<16x128xf32>
    %c0_3 = arith.constant 0 : index
    %c0_4 = arith.constant 0 : index
    %3 = vector.load %arg3[%c0_3, %c0_4] : memref<1x128xf32, #tpu.memory_space<vmem>>, vector<1x128xf32>
    %4 = vector.broadcast %3 : vector<1x128xf32> to vector<16x128xf32>
    %5 = arith.addf %2, %4 : vector<16x128xf32>
    %cst_5 = arith.constant 0.000000e+00 : f32
    %6 = vector.broadcast %cst_5 : f32 to vector<16x128xf32>
    %7 = arith.maximumf %5, %6 : vector<16x128xf32>
    %8 = arith.truncf %7 : vector<16x128xf32> to vector<16x128xbf16>
    %c0_6 = arith.constant 0 : index
    %c0_7 = arith.constant 0 : index
    %9 = vector.load %arg4[%c0_6, %c0_7] : memref<128x128xbf16, #tpu.memory_space<vmem>>, vector<128x128xbf16>
    %cst_8 = arith.constant dense<0.000000e+00> : vector<16x128xf32>
    %10 = tpu.matmul %8, %9, %cst_8 {dimension_numbers = #tpu.dot_dimension_numbers<[1], [0], [0], [1], [0, 0, 1, 1], [], []>} : vector<16x128xbf16>, vector<128x128xbf16>, vector<16x128xf32> -> vector<16x128xf32>
    %c0_9 = arith.constant 0 : index
    %c0_10 = arith.constant 0 : index
    %11 = vector.load %arg5[%c0_9, %c0_10] : memref<1x128xf32, #tpu.memory_space<vmem>>, vector<1x128xf32>
    %12 = vector.broadcast %11 : vector<1x128xf32> to vector<16x128xf32>
    %13 = arith.addf %10, %12 : vector<16x128xf32>
    %cst_11 = arith.constant 0.000000e+00 : f32
    %14 = vector.broadcast %cst_11 : f32 to vector<16x128xf32>
    %15 = arith.maximumf %13, %14 : vector<16x128xf32>
    %c0_12 = arith.constant 0 : index
    %c0_13 = arith.constant 0 : index
    %16 = vector.load %arg6[%c0_12, %c0_13] : memref<1x128xf32, #tpu.memory_space<vmem>>, vector<1x128xf32>
    %17 = vector.broadcast %16 : vector<1x128xf32> to vector<16x128xf32>
    %18 = arith.mulf %15, %17 : vector<16x128xf32>
    %cst_14 = arith.constant dense<0.000000e+00> : vector<16xf32>
    %19 = vector.multi_reduction <add>, %18, %cst_14 [1] : vector<16x128xf32> to vector<16xf32>
    %20 = vector.shape_cast %19 : vector<16xf32> to vector<16x1xf32>
    %c0_15 = arith.constant 0 : index
    %c0_16 = arith.constant 0 : index
    %21 = memref.load %arg7[%c0_15, %c0_16] : memref<1x1xf32, #tpu.memory_space<smem>>
    %22 = vector.broadcast %21 : f32 to vector<16x1xf32>
    %23 = arith.addf %20, %22 : vector<16x1xf32>
    %24 = tpu.transpose %23, [1, 0] : vector<16x1xf32> -> vector<1x16xf32>
    %25 = arith.negf %24 : vector<1x16xf32>
    %26 = math.exp %25 : vector<1x16xf32>
    %cst_17 = arith.constant 1.000000e+00 : f32
    %27 = vector.broadcast %cst_17 : f32 to vector<1x16xf32>
    %28 = arith.addf %27, %26 : vector<1x16xf32>
    %29 = arith.divf %27, %28 : vector<1x16xf32>
    %c0_18 = arith.constant 0 : index
    %c0_19 = arith.constant 0 : index
    %30 = vector.load %arg8[%c0_18, %c0_19] : memref<1x16xf32, #tpu.memory_space<vmem>>, vector<1x16xf32>
    tpu.vector_store %arg8[%c0_18, %c0_19], %29 {strides = array<i32>} : memref<1x16xf32, #tpu.memory_space<vmem>>, vector<1x16xf32>,
    return
  }
  func.func @transform_0(%arg0: i32) -> (i32, i32) {
    %c0_i32 = arith.constant 0 : i32
    %c0_i32_0 = arith.constant 0 : i32
    return %arg0, %c0_i32 : i32, i32
  }
  func.func @transform_1(%arg0: i32) -> (i32, i32) {
    %c0_i32 = arith.constant 0 : i32
    %c0_i32_0 = arith.constant 0 : i32
    %c0_i32_1 = arith.constant 0 : i32
    return %c0_i32, %c0_i32_0 : i32, i32
  }
  func.func @transform_2(%arg0: i32) -> (i32, i32) {
    %c0_i32 = arith.constant 0 : i32
    %c0_i32_0 = arith.constant 0 : i32
    %c0_i32_1 = arith.constant 0 : i32
    return %c0_i32, %c0_i32_0 : i32, i32
  }
  func.func @transform_3(%arg0: i32) -> (i32, i32) {
    %c0_i32 = arith.constant 0 : i32
    %c0_i32_0 = arith.constant 0 : i32
    %c0_i32_1 = arith.constant 0 : i32
    return %c0_i32, %c0_i32_0 : i32, i32
  }
  func.func @transform_4(%arg0: i32) -> (i32, i32) {
    %c0_i32 = arith.constant 0 : i32
    %c0_i32_0 = arith.constant 0 : i32
    %c0_i32_1 = arith.constant 0 : i32
    return %c0_i32, %c0_i32_0 : i32, i32
  }
  func.func @transform_5(%arg0: i32) -> (i32, i32) {
    %c0_i32 = arith.constant 0 : i32
    %c0_i32_0 = arith.constant 0 : i32
    %c0_i32_1 = arith.constant 0 : i32
    return %c0_i32, %c0_i32_0 : i32, i32
  }
  func.func @transform_6(%arg0: i32) -> (i32, i32) {
    %c0_i32 = arith.constant 0 : i32
    %c0_i32_0 = arith.constant 0 : i32
    %c0_i32_1 = arith.constant 0 : i32
    return %c0_i32, %c0_i32_0 : i32, i32
  }
  func.func @transform_7(%arg0: i32) -> (i32, i32) {
    %c0_i32 = arith.constant 0 : i32
    %c0_i32_0 = arith.constant 0 : i32
    return %c0_i32, %arg0 : i32, i32
  }
}

</mosaic_0001>

<llo_original>
// kernel: tpu_custom_call.1
$region0: #{tpu_custom_call.1}
  #allocation0 [shape = 'u32[]', space=smem, size = 0x4, offset = 0x4, fixed_abs, tag = 'smem constant byte address 0x4 - core index']
  #allocation1 [shape = 'u32[144,128]{1,0:T(1,128)}', space=vmem, size = 0x12000, scoped, tag = 'internal scratch']
  #allocation2 [shape = 'f32[1,1]{1,0:T(1,128)S(6)}', space=smem, size = 0x200, scoped, tag = 'scoped memory for tpu_custom_call.1']
  %s0 = inlined_call_operand.hbm [shape: bf16[16,128], index: 0, kind: input, shape index: {}]
  %s1 = inlined_call_operand.hbm [shape: bf16[128,128], index: 1, kind: input, shape index: {}]
  %s2 = inlined_call_operand.vmem [shape: f32[1,128], index: 2, kind: input, shape index: {}]
  %s3 = inlined_call_operand.hbm [shape: bf16[128,128], index: 3, kind: input, shape index: {}]
  %s4 = inlined_call_operand.vmem [shape: f32[1,128], index: 4, kind: input, shape index: {}]
  %s5 = inlined_call_operand.vmem [shape: f32[1,128], index: 5, kind: input, shape index: {}]
  %s6 = inlined_call_operand.<no memory space> [shape: f32[1,1], index: 6, kind: input, shape index: {}]
  %s7 = inlined_call_operand.hbm [shape: f32[1,16], index: 7, kind: output, shape index: {}]
  %s8 = sld [smem:[#allocation0]]
  $region50: #{tpu_custom_call.1} parent=0
    _
  %s10 = ssub.s32 1, %s8
  %s11 = scalar_select 0, %s10, %s8
  %12 = sst [smem:[#allocation2]] %s6
  $region1: #{tpu_custom_call.1} parent=0
    #allocation3 [shape = 'u8[4096]{0}', space=vmem, size = 0x1000, scoped, tag = 'input window, operand 0, single buffered']
    #allocation4 [shape = 's32[1]{0}', space=sflag, size = 0x4, scoped, tag = 'scoped memory for tpu_custom_call.1']
    #allocation5 [shape = 's32[1]{0}', space=sflag, size = 0x4, scoped, tag = 'scoped memory for tpu_custom_call.1']
    #allocation6 [shape = 'u8[32768]{0}', space=vmem, size = 0x8000, scoped, tag = 'input window, operand 1, single buffered']
    #allocation7 [shape = 's32[1]{0}', space=sflag, size = 0x4, scoped, tag = 'scoped memory for tpu_custom_call.1']
    #allocation8 [shape = 'u8[32768]{0}', space=vmem, size = 0x8000, scoped, tag = 'input window, operand 3, single buffered']
    #allocation9 [shape = 'u8[512]{0}', space=vmem, size = 0x400, scoped, tag = 'output window, operand 0, single buffered']
    %13 = vsyncpa [#allocation4], 0
    %14 = vsyncpa [#allocation7], 0
    %15 = vsyncpa [#allocation5], 0
    // Predicated region
    $region2: #{tpu_custom_call.1} parent=1 // pred_check
      _
    $region3: #{tpu_custom_call.1} parent=1 // pred_check_branch
      %17 = sbr.rel (0) target = $region5
    $region4: #{tpu_custom_call.1} parent=1 // pred_region
      %s19 = ssub.s32 128, 128
      %20 = vsyncadd [#allocation4], %s19
      %s21 = sshll.u32 [#allocation3], 4
      %s22 = int_to_ptr.vmem [resolvable:$true] %s21
      %27 = dma.hbm_to_vmem [thread:$0]  %s0, 128, %s22, [#allocation4], 64, 64, 4
    $region5: #{tpu_custom_call.1} parent=1 // pred_fallthru
      _
    // Predicated region
    $region6: #{tpu_custom_call.1} parent=1 // pred_check
      _
    $region7: #{tpu_custom_call.1} parent=1 // pred_check_branch
      %29 = sbr.rel (0) target = $region9
    $region8: #{tpu_custom_call.1} parent=1 // pred_region
      %s31 = ssub.s32 1024, 1024
      %32 = vsyncadd [#allocation7], %s31
      %s33 = sshll.u32 [#allocation6], 4
      %s34 = int_to_ptr.vmem [resolvable:$true] %s33
      %39 = dma.hbm_to_vmem [thread:$0]  %s1, 1024, %s34, [#allocation7], 64, 64, 4
    $region9: #{tpu_custom_call.1} parent=1 // pred_fallthru
      _
    // Predicated region
    $region10: #{tpu_custom_call.1} parent=1 // pred_check
      _
    $region11: #{tpu_custom_call.1} parent=1 // pred_check_branch
      %41 = sbr.rel (0) target = $region13
    $region12: #{tpu_custom_call.1} parent=1 // pred_region
      _
    $region13: #{tpu_custom_call.1} parent=1 // pred_fallthru
      _
    // Predicated region
    $region14: #{tpu_custom_call.1} parent=1 // pred_check
      _
    $region15: #{tpu_custom_call.1} parent=1 // pred_check_branch
      %43 = sbr.rel (0) target = $region17
    $region16: #{tpu_custom_call.1} parent=1 // pred_region
      %s45 = ssub.s32 1024, 1024
      %46 = vsyncadd [#allocation7], %s45
      %s47 = sshll.u32 [#allocation8], 4
      %s48 = int_to_ptr.vmem [resolvable:$true] %s47
      %53 = dma.hbm_to_vmem [thread:$0]  %s3, 1024, %s48, [#allocation7], 64, 64, 4
    $region17: #{tpu_custom_call.1} parent=1 // pred_fallthru
      _
    // Predicated region
    $region18: #{tpu_custom_call.1} parent=1 // pred_check
      _
    $region19: #{tpu_custom_call.1} parent=1 // pred_check_branch
      %55 = sbr.rel (0) target = $region21
    $region20: #{tpu_custom_call.1} parent=1 // pred_region
      _
    $region21: #{tpu_custom_call.1} parent=1 // pred_fallthru
      _
    // Predicated region
    $region22: #{tpu_custom_call.1} parent=1 // pred_check
      _
    $region23: #{tpu_custom_call.1} parent=1 // pred_check_branch
      %57 = sbr.rel (0) target = $region25
    $region24: #{tpu_custom_call.1} parent=1 // pred_region
      _
    $region25: #{tpu_custom_call.1} parent=1 // pred_fallthru
      _
    // Predicated region
    $region26: #{tpu_custom_call.1} parent=1 // pred_check
      _
    $region27: #{tpu_custom_call.1} parent=1 // pred_check_branch
      %59 = sbr.rel (0) target = $region29
    $region28: #{tpu_custom_call.1} parent=1 // pred_region
      _
    $region29: #{tpu_custom_call.1} parent=1 // pred_fallthru
      _
    // Predicated region
    $region30: #{tpu_custom_call.1} parent=1 // pred_check
      _
    $region31: #{tpu_custom_call.1} parent=1 // pred_check_branch
      %61 = sbr.rel (0) target = $region33
    $region32: #{tpu_custom_call.1} parent=1 // pred_region
      %62 = dma.done [#allocation4], 128
    $region33: #{tpu_custom_call.1} parent=1 // pred_fallthru
      _
    // Predicated region
    $region34: #{tpu_custom_call.1} parent=1 // pred_check
      _
    $region35: #{tpu_custom_call.1} parent=1 // pred_check_branch
      %64 = sbr.rel (0) target = $region37
    $region36: #{tpu_custom_call.1} parent=1 // pred_region
      %65 = dma.done [#allocation7], 1024
    $region37: #{tpu_custom_call.1} parent=1 // pred_fallthru
      _
    // Predicated region
    $region38: #{tpu_custom_call.1} parent=1 // pred_check
      _
    $region39: #{tpu_custom_call.1} parent=1 // pred_check_branch
      %67 = sbr.rel (0) target = $region41
    $region40: #{tpu_custom_call.1} parent=1 // pred_region
      %68 = dma.done [#allocation7], 1024
    $region41: #{tpu_custom_call.1} parent=1 // pred_fallthru
      _
    %v70 = vld [vmem:[#allocation3] sm:$0xf]
    %v71 = vld [vmem:[#allocation3 + $0x4] sm:$0xf]
    %v72 = vld [vmem:[#allocation6] sm:$0xf]
    %v73 = vld [vmem:[#allocation6 + $0x4] sm:$0xf]
    %v74 = vld [vmem:[#allocation6 + $0x8] sm:$0xf]
    %v75 = vld [vmem:[#allocation6 + $0xc] sm:$0xf]
    %v76 = vld [vmem:[#allocation6 + $0x10] sm:$0xf]
    %v77 = vld [vmem:[#allocation6 + $0x14] sm:$0xf]
    %v78 = vld [vmem:[#allocation6 + $0x18] sm:$0xf]
    %v79 = vld [vmem:[#allocation6 + $0x1c] sm:$0xf]
    %v80 = vld [vmem:[#allocation6 + $0x20] sm:$0xf]
    %v81 = vld [vmem:[#allocation6 + $0x24] sm:$0xf]
    %v82 = vld [vmem:[#allocation6 + $0x28] sm:$0xf]
    %v83 = vld [vmem:[#allocation6 + $0x2c] sm:$0xf]
    %v84 = vld [vmem:[#allocation6 + $0x30] sm:$0xf]
    %v85 = vld [vmem:[#allocation6 + $0x34] sm:$0xf]
    %v86 = vld [vmem:[#allocation6 + $0x38] sm:$0xf]
    %v87 = vld [vmem:[#allocation6 + $0x3c] sm:$0xf]
    %v88 = vld [vmem:[%s2] sm:$0x1]
    %v90 = vlaneseq
    %v91 = vshrl.u32 %v90, 7
    %v92 = vsub.s32 0, %v91
    %v93 = vrot.slane %v88, %v92
    %v97 = vunpack.c.l.b16 %v70
    %v98 = vunpack.c.l.b16 %v71
    %v99 = vpack.c.b16 %v98, %v97
    %v117 = vunpack.c.l.b16 %v72
    %v118 = vunpack.c.l.b16 %v73
    %v119 = vunpack.c.l.b16 %v74
    %v120 = vunpack.c.l.b16 %v75
    %v121 = vunpack.c.l.b16 %v76
    %v122 = vunpack.c.l.b16 %v77
    %v123 = vunpack.c.l.b16 %v78
    %v124 = vunpack.c.l.b16 %v79
    %v125 = vunpack.c.l.b16 %v80
    %v126 = vunpack.c.l.b16 %v81
    %v127 = vunpack.c.l.b16 %v82
    %v128 = vunpack.c.l.b16 %v83
    %v129 = vunpack.c.l.b16 %v84
    %v130 = vunpack.c.l.b16 %v85
    %v131 = vunpack.c.l.b16 %v86
    %v132 = vunpack.c.l.b16 %v87
    %v133 = vpack.c.b16 %v118, %v117
    %v134 = vpack.c.b16 %v120, %v119
    %v135 = vpack.c.b16 %v122, %v121
    %v136 = vpack.c.b16 %v124, %v123
    %v137 = vpack.c.b16 %v126, %v125
    %v138 = vpack.c.b16 %v128, %v127
    %v139 = vpack.c.b16 %v130, %v129
    %v140 = vpack.c.b16 %v132, %v131
    %149 = vmatprep.subr.bf16.mxu0 0
    %150 = vmatpush1.bf16.msra.mxu0 %v133
    %151 = vmatprep.subr.bf16.mxu0 0
    %152 = vmatpush1.bf16.msra.mxu0 %v134
    %153 = vmatprep.subr.bf16.mxu0 0
    %154 = vmatpush1.bf16.msra.mxu0 %v135
    %155 = vmatprep.subr.bf16.mxu0 0
    %156 = vmatpush1.bf16.msra.mxu0 %v136
    %157 = vmatprep.subr.bf16.mxu0 0
    %158 = vmatpush1.bf16.msra.mxu0 %v137
    %159 = vmatprep.subr.bf16.mxu0 0
    %160 = vmatpush1.bf16.msra.mxu0 %v138
    %161 = vmatprep.subr.bf16.mxu0 0
    %162 = vmatpush1.bf16.msra.mxu0 %v139
    %163 = vmatprep.subr.bf16.mxu0 0
    %164 = vmatpush1.bf16.msra.mxu0 %v140
    %165 = vmatprep.subr.bf16.mxu0 0
    %166 = vmatpush1.bf16.msra.mxu0 0
    %167 = vmatprep.subr.bf16.mxu0 0
    %168 = vmatpush1.bf16.msra.mxu0 0
    %169 = vmatprep.subr.bf16.mxu0 0
    %170 = vmatpush1.bf16.msra.mxu0 0
    %171 = vmatprep.subr.bf16.mxu0 0
    %172 = vmatpush1.bf16.msra.mxu0 0
    %173 = vmatprep.subr.bf16.mxu0 0
    %174 = vmatpush1.bf16.msra.mxu0 0
    %175 = vmatprep.subr.bf16.mxu0 0
    %176 = vmatpush1.bf16.msra.mxu0 0
    %177 = vmatprep.subr.bf16.mxu0 0
    %178 = vmatpush1.bf16.msra.mxu0 0
    %179 = vmatprep.subr.bf16.mxu0 0
    %180 = vmatpush1.bf16.msra.mxu0 0
    %181 = vmatprep.mubr.bf16.mxu0 0
    %182 = vmatmul.mubr.bf16.gmra.mrb[0].mxu0 %v99
    %v183 = vpop.f32.mrb[0].mxu0
    %v184 = vadd.f32 %v93, %v183
    %v185 = vpop.f32.mrb[0].mxu0
    %v186 = vpop.f32.mrb[0].mxu0
    %v187 = vadd.f32 %v93, %v186
    %v188 = vpop.f32.mrb[0].mxu0
    %189 = vdwg.mxu0
    %v190 = vmax.f32 %v184, 0.0
    %v191 = vmax.f32 %v187, 0.0
    %v192 = vpack.c.bf16 %v191, %v190
    %v193 = vld [vmem:[#allocation8] sm:$0xf]
    %v194 = vld [vmem:[#allocation8 + $0x4] sm:$0xf]
    %v195 = vld [vmem:[#allocation8 + $0x8] sm:$0xf]
    %v196 = vld [vmem:[#allocation8 + $0xc] sm:$0xf]
    %v197 = vld [vmem:[#allocation8 + $0x10] sm:$0xf]
    %v198 = vld [vmem:[#allocation8 + $0x14] sm:$0xf]
    %v199 = vld [vmem:[#allocation8 + $0x18] sm:$0xf]
    %v200 = vld [vmem:[#allocation8 + $0x1c] sm:$0xf]
    %v201 = vld [vmem:[#allocation8 + $0x20] sm:$0xf]
    %v202 = vld [vmem:[#allocation8 + $0x24] sm:$0xf]
    %v203 = vld [vmem:[#allocation8 + $0x28] sm:$0xf]
    %v204 = vld [vmem:[#allocation8 + $0x2c] sm:$0xf]
    %v205 = vld [vmem:[#allocation8 + $0x30] sm:$0xf]
    %v206 = vld [vmem:[#allocation8 + $0x34] sm:$0xf]
    %v207 = vld [vmem:[#allocation8 + $0x38] sm:$0xf]
    %v208 = vld [vmem:[#allocation8 + $0x3c] sm:$0xf]
    %v209 = vld [vmem:[%s4] sm:$0x1]
    %v211 = vlaneseq
    %v212 = vshrl.u32 %v211, 7
    %v213 = vsub.s32 0, %v212
    %v214 = vrot.slane %v209, %v213
    %v232 = vunpack.c.l.b16 %v193
    %v233 = vunpack.c.l.b16 %v194
    %v234 = vunpack.c.l.b16 %v195
    %v235 = vunpack.c.l.b16 %v196
    %v236 = vunpack.c.l.b16 %v197
    %v237 = vunpack.c.l.b16 %v198
    %v238 = vunpack.c.l.b16 %v199
    %v239 = vunpack.c.l.b16 %v200
    %v240 = vunpack.c.l.b16 %v201
    %v241 = vunpack.c.l.b16 %v202
    %v242 = vunpack.c.l.b16 %v203
    %v243 = vunpack.c.l.b16 %v204
    %v244 = vunpack.c.l.b16 %v205
    %v245 = vunpack.c.l.b16 %v206
    %v246 = vunpack.c.l.b16 %v207
    %v247 = vunpack.c.l.b16 %v208
    %v248 = vpack.c.b16 %v233, %v232
    %v249 = vpack.c.b16 %v235, %v234
    %v250 = vpack.c.b16 %v237, %v236
    %v251 = vpack.c.b16 %v239, %v238
    %v252 = vpack.c.b16 %v241, %v240
    %v253 = vpack.c.b16 %v243, %v242
    %v254 = vpack.c.b16 %v245, %v244
    %v255 = vpack.c.b16 %v247, %v246
    %264 = vmatprep.subr.bf16.mxu0 0
    %265 = vmatpush1.bf16.msra.mxu0 %v248
    %266 = vmatprep.subr.bf16.mxu0 0
    %267 = vmatpush1.bf16.msra.mxu0 %v249
    %268 = vmatprep.subr.bf16.mxu0 0
    %269 = vmatpush1.bf16.msra.mxu0 %v250
    %270 = vmatprep.subr.bf16.mxu0 0
    %271 = vmatpush1.bf16.msra.mxu0 %v251
    %272 = vmatprep.subr.bf16.mxu0 0
    %273 = vmatpush1.bf16.msra.mxu0 %v252
    %274 = vmatprep.subr.bf16.mxu0 0
    %275 = vmatpush1.bf16.msra.mxu0 %v253
    %276 = vmatprep.subr.bf16.mxu0 0
    %277 = vmatpush1.bf16.msra.mxu0 %v254
    %278 = vmatprep.subr.bf16.mxu0 0
    %279 = vmatpush1.bf16.msra.mxu0 %v255
    %280 = vmatprep.subr.bf16.mxu0 0
    %281 = vmatpush1.bf16.msra.mxu0 0
    %282 = vmatprep.subr.bf16.mxu0 0
    %283 = vmatpush1.bf16.msra.mxu0 0
    %284 = vmatprep.subr.bf16.mxu0 0
    %285 = vmatpush1.bf16.msra.mxu0 0
    %286 = vmatprep.subr.bf16.mxu0 0
    %287 = vmatpush1.bf16.msra.mxu0 0
    %288 = vmatprep.subr.bf16.mxu0 0
    %289 = vmatpush1.bf16.msra.mxu0 0
    %290 = vmatprep.subr.bf16.mxu0 0
    %291 = vmatpush1.bf16.msra.mxu0 0
    %292 = vmatprep.subr.bf16.mxu0 0
    %293 = vmatpush1.bf16.msra.mxu0 0
    %294 = vmatprep.subr.bf16.mxu0 0
    %295 = vmatpush1.bf16.msra.mxu0 0
    %296 = vmatprep.mubr.bf16.mxu0 0
    %297 = vmatmul.mubr.bf16.gmra.mrb[0].mxu0 %v192
    %v298 = vpop.f32.mrb[0].mxu0
    %v299 = vadd.f32 %v214, %v298
    %v300 = vpop.f32.mrb[0].mxu0
    %v301 = vpop.f32.mrb[0].mxu0
    %v302 = vadd.f32 %v214, %v301
    %v303 = vpop.f32.mrb[0].mxu0
    %304 = vdwg.mxu0
    %v305 = vmax.f32 %v299, 0.0
    %v306 = vmax.f32 %v302, 0.0
    %v307 = vld [vmem:[%s5] sm:$0x1]
    %v309 = vlaneseq
    %v310 = vshrl.u32 %v309, 7
    %v311 = vsub.s32 0, %v310
    %v312 = vrot.slane %v307, %v311
    %v314 = vmul.f32 %v305, %v312
    %v315 = vmul.f32 %v306, %v312
    %316 = vadd.xlane.f32.xlu0 %v314
    %v317 = vpop.xlane.xlu0 %316
    %318 = vadd.xlane.f32.xlu0 %v315
    %v319 = vpop.xlane.xlu0 %318
    %s320 = sld [smem:[#allocation2]]
    %v321 = vstv %s320
    %v322 = vadd.f32 %v317, %v321
    %v323 = vadd.f32 %v319, %v321
    %324 = vxpose.xlu0.b32.start [1/16] %v322, 128
    %325 = vxpose.xlu0.b32.cont [2/16] %v323, 128
    %326 = vxpose.xlu0.b32.cont [3/16] 0.0, 128
    %327 = vxpose.xlu0.b32.cont [4/16] 0.0, 128
    %328 = vxpose.xlu0.b32.cont [5/16] 0.0, 128
    %329 = vxpose.xlu0.b32.cont [6/16] 0.0, 128
    %330 = vxpose.xlu0.b32.cont [7/16] 0.0, 128
    %331 = vxpose.xlu0.b32.cont [8/16] 0.0, 128
    %332 = vxpose.xlu0.b32.cont [9/16] 0.0, 128
    %333 = vxpose.xlu0.b32.cont [10/16] 0.0, 128
    %334 = vxpose.xlu0.b32.cont [11/16] 0.0, 128
    %335 = vxpose.xlu0.b32.cont [12/16] 0.0, 128
    %336 = vxpose.xlu0.b32.cont [13/16] 0.0, 128
    %337 = vxpose.xlu0.b32.cont [14/16] 0.0, 128
    %338 = vxpose.xlu0.b32.cont [15/16] 0.0, 128
    %339 = vxpose.xlu0.b32.end [16/16] 0.0, 128
    %v340 = vpop.trf.xlu0
    %v341 = vpop.trf.xlu0
    %v342 = vpop.trf.xlu0
    %v343 = vpop.trf.xlu0
    %v344 = vpop.trf.xlu0
    %v345 = vpop.trf.xlu0
    %v346 = vpop.trf.xlu0
    %v347 = vpop.trf.xlu0
    %v348 = vpop.trf.xlu0
    %v349 = vpop.trf.xlu0
    %v350 = vpop.trf.xlu0
    %v351 = vpop.trf.xlu0
    %v352 = vpop.trf.xlu0
    %v353 = vpop.trf.xlu0
    %v354 = vpop.trf.xlu0
    %v355 = vpop.trf.xlu0
    %v356 = vxor.u32 %v340, 2147483648
    %v357 = vmul.f32 %v356, 1.442695
    %v358 = vpow.pop %v357
    %v359 = vadd.f32 %v358, 1.0
    %v360 = vrcp.pop %v359
    %v361 = vmul.f32 1.0, %v360
    %vm362 = vcmask 122880
    %363 = vst.msk [vmem:[#allocation9] sm:$0x1] %vm362, %v361
    // Predicated region
    $region42: #{tpu_custom_call.1} parent=1 // pred_check
      _
    $region43: #{tpu_custom_call.1} parent=1 // pred_check_branch
      %365 = sbr.rel (0) target = $region45
    $region44: #{tpu_custom_call.1} parent=1 // pred_region
      %s367 = ssub.s32 16, 16
      %368 = vsyncadd [#allocation5], %s367
      %s370 = sshll.u32 [#allocation9], 4
      %s371 = int_to_ptr.vmem [resolvable:$true] %s370
      %373 = dma.vmem_to_hbm [thread:$0]  %s371, 16, %s7, [#allocation5]
    $region45: #{tpu_custom_call.1} parent=1 // pred_fallthru
      _
    // Predicated region
    $region46: #{tpu_custom_call.1} parent=1 // pred_check
      _
    $region47: #{tpu_custom_call.1} parent=1 // pred_check_branch
      %375 = sbr.rel (0) target = $region49
    $region48: #{tpu_custom_call.1} parent=1 // pred_region
      %376 = dma.done [#allocation5], 16
    $region49: #{tpu_custom_call.1} parent=1 // pred_fallthru
      _
    %377 = vsyncpa [#allocation4], 1
    %378 = vsyncpa [#allocation7], 1
    %379 = vsyncpa [#allocation5], 1

// kernel: tpu_custom_call.1
$region0: #{tpu_custom_call.1}
  #allocation0 [shape = 'u32[]', space=smem, size = 0x4, offset = 0x4, fixed_abs, tag = 'smem constant byte address 0x4 - core index']
  #allocation1 [shape = 'u32[144,128]{1,0:T(1,128)}', space=vmem, size = 0x12000, scoped, tag = 'internal scratch']
  #allocation2 [shape = 'f32[1,1]{1,0:T(1,128)S(6)}', space=smem, size = 0x200, scoped, tag = 'scoped memory for tpu_custom_call.1']
  %s0 = inlined_call_operand.hbm [shape: bf16[16,128], index: 0, kind: input, shape index: {}]
  %s1 = inlined_call_operand.hbm [shape: bf16[128,128], index: 1, kind: input, shape index: {}]
  %s2 = inlined_call_operand.vmem [shape: f32[1,128], index: 2, kind: input, shape index: {}]
  %s3 = inlined_call_operand.hbm [shape: bf16[128,128], index: 3, kind: input, shape index: {}]
  %s4 = inlined_call_operand.vmem [shape: f32[1,128], index: 4, kind: input, shape index: {}]
  %s5 = inlined_call_operand.vmem [shape: f32[1,128], index: 5, kind: input, shape index: {}]
  %s6 = inlined_call_operand.<no memory space> [shape: f32[1,1], index: 6, kind: input, shape index: {}]
  %s7 = inlined_call_operand.hbm [shape: f32[1,16], index: 7, kind: output, shape index: {}]
  %s8 = sld [smem:[#allocation0]]
  $region50: #{tpu_custom_call.1} parent=0
    _
  %s10 = ssub.s32 1, %s8
  %s11 = scalar_select 0, %s10, %s8
  %12 = sst [smem:[#allocation2]] %s6
  $region1: #{tpu_custom_call.1} parent=0
    #allocation3 [shape = 'u8[4096]{0}', space=vmem, size = 0x1000, scoped, tag = 'input window, operand 0, single buffered']
    #allocation4 [shape = 's32[1]{0}', space=sflag, size = 0x4, scoped, tag = 'scoped memory for tpu_custom_call.1']
    #allocation5 [shape = 's32[1]{0}', space=sflag, size = 0x4, scoped, tag = 'scoped memory for tpu_custom_call.1']
    #allocation6 [shape = 'u8[32768]{0}', space=vmem, size = 0x8000, scoped, tag = 'input window, operand 1, single buffered']
    #allocation7 [shape = 's32[1]{0}', space=sflag, size = 0x4, scoped, tag = 'scoped memory for tpu_custom_call.1']
    #allocation8 [shape = 'u8[32768]{0}', space=vmem, size = 0x8000, scoped, tag = 'input window, operand 3, single buffered']
    #allocation9 [shape = 'u8[512]{0}', space=vmem, size = 0x400, scoped, tag = 'output window, operand 0, single buffered']
    %13 = vsyncpa [#allocation4], 0
    %14 = vsyncpa [#allocation7], 0
    %15 = vsyncpa [#allocation5], 0
    // Predicated region
    $region2: #{tpu_custom_call.1} parent=1 // pred_check
      _
    $region3: #{tpu_custom_call.1} parent=1 // pred_check_branch
      %17 = sbr.rel (0) target = $region5
    $region4: #{tpu_custom_call.1} parent=1 // pred_region
      %s19 = ssub.s32 128, 128
      %20 = vsyncadd [#allocation4], %s19
      %s21 = sshll.u32 [#allocation3], 4
      %s22 = int_to_ptr.vmem [resolvable:$true] %s21
      %27 = dma.hbm_to_vmem [thread:$0]  %s0, 128, %s22, [#allocation4], 64, 64, 4
    $region5: #{tpu_custom_call.1} parent=1 // pred_fallthru
      _
    // Predicated region
    $region6: #{tpu_custom_call.1} parent=1 // pred_check
      _
    $region7: #{tpu_custom_call.1} parent=1 // pred_check_branch
      %29 = sbr.rel (0) target = $region9
    $region8: #{tpu_custom_call.1} parent=1 // pred_region
      %s31 = ssub.s32 1024, 1024
      %32 = vsyncadd [#allocation7], %s31
      %s33 = sshll.u32 [#allocation6], 4
      %s34 = int_to_ptr.vmem [resolvable:$true] %s33
      %39 = dma.hbm_to_vmem [thread:$0]  %s1, 1024, %s34, [#allocation7], 64, 64, 4
    $region9: #{tpu_custom_call.1} parent=1 // pred_fallthru
      _
    // Predicated region
    $region10: #{tpu_custom_call.1} parent=1 // pred_check
      _
    $region11: #{tpu_custom_call.1} parent=1 // pred_check_branch
      %41 = sbr.rel (0) target = $region13
    $region12: #{tpu_custom_call.1} parent=1 // pred_region
      _
    $region13: #{tpu_custom_call.1} parent=1 // pred_fallthru
      _
    // Predicated region
    $region14: #{tpu_custom_call.1} parent=1 // pred_check
      _
    $region15: #{tpu_custom_call.1} parent=1 // pred_check_branch
      %43 = sbr.rel (0) target = $region17
    $region16: #{tpu_custom_call.1} parent=1 // pred_region
      %s45 = ssub.s32 1024, 1024
      %46 = vsyncadd [#allocation7], %s45
      %s47 = sshll.u32 [#allocation8], 4
      %s48 = int_to_ptr.vmem [resolvable:$true] %s47
      %53 = dma.hbm_to_vmem [thread:$0]  %s3, 1024, %s48, [#allocation7], 64, 64, 4
    $region17: #{tpu_custom_call.1} parent=1 // pred_fallthru
      _
    // Predicated region
    $region18: #{tpu_custom_call.1} parent=1 // pred_check
      _
    $region19: #{tpu_custom_call.1} parent=1 // pred_check_branch
      %55 = sbr.rel (0) target = $region21
    $region20: #{tpu_custom_call.1} parent=1 // pred_region
      _
    $region21: #{tpu_custom_call.1} parent=1 // pred_fallthru
      _
    // Predicated region
    $region22: #{tpu_custom_call.1} parent=1 // pred_check
      _
    $region23: #{tpu_custom_call.1} parent=1 // pred_check_branch
      %57 = sbr.rel (0) target = $region25
    $region24: #{tpu_custom_call.1} parent=1 // pred_region
      _
    $region25: #{tpu_custom_call.1} parent=1 // pred_fallthru
      _
    // Predicated region
    $region26: #{tpu_custom_call.1} parent=1 // pred_check
      _
    $region27: #{tpu_custom_call.1} parent=1 // pred_check_branch
      %59 = sbr.rel (0) target = $region29
    $region28: #{tpu_custom_call.1} parent=1 // pred_region
      _
    $region29: #{tpu_custom_call.1} parent=1 // pred_fallthru
      _
    // Predicated region
    $region30: #{tpu_custom_call.1} parent=1 // pred_check
      _
    $region31: #{tpu_custom_call.1} parent=1 // pred_check_branch
      %61 = sbr.rel (0) target = $region33
    $region32: #{tpu_custom_call.1} parent=1 // pred_region
      %62 = dma.done [#allocation4], 128
    $region33: #{tpu_custom_call.1} parent=1 // pred_fallthru
      _
    // Predicated region
    $region34: #{tpu_custom_call.1} parent=1 // pred_check
      _
    $region35: #{tpu_custom_call.1} parent=1 // pred_check_branch
      %64 = sbr.rel (0) target = $region37
    $region36: #{tpu_custom_call.1} parent=1 // pred_region
      %65 = dma.done [#allocation7], 1024
    $region37: #{tpu_custom_call.1} parent=1 // pred_fallthru
      _
    // Predicated region
    $region38: #{tpu_custom_call.1} parent=1 // pred_check
      _
    $region39: #{tpu_custom_call.1} parent=1 // pred_check_branch
      %67 = sbr.rel (0) target = $region41
    $region40: #{tpu_custom_call.1} parent=1 // pred_region
      %68 = dma.done [#allocation7], 1024
    $region41: #{tpu_custom_call.1} parent=1 // pred_fallthru
      _
    %v70 = vld [vmem:[#allocation3] sm:$0xf]
    %v71 = vld [vmem:[#allocation3 + $0x4] sm:$0xf]
    %v72 = vld [vmem:[#allocation6] sm:$0xf]
    %v73 = vld [vmem:[#allocation6 + $0x4] sm:$0xf]
    %v74 = vld [vmem:[#allocation6 + $0x8] sm:$0xf]
    %v75 = vld [vmem:[#allocation6 + $0xc] sm:$0xf]
    %v76 = vld [vmem:[#allocation6 + $0x10] sm:$0xf]
    %v77 = vld [vmem:[#allocation6 + $0x14] sm:$0xf]
    %v78 = vld [vmem:[#allocation6 + $0x18] sm:$0xf]
    %v79 = vld [vmem:[#allocation6 + $0x1c] sm:$0xf]
    %v80 = vld [vmem:[#allocation6 + $0x20] sm:$0xf]
    %v81 = vld [vmem:[#allocation6 + $0x24] sm:$0xf]
    %v82 = vld [vmem:[#allocation6 + $0x28] sm:$0xf]
    %v83 = vld [vmem:[#allocation6 + $0x2c] sm:$0xf]
    %v84 = vld [vmem:[#allocation6 + $0x30] sm:$0xf]
    %v85 = vld [vmem:[#allocation6 + $0x34] sm:$0xf]
    %v86 = vld [vmem:[#allocation6 + $0x38] sm:$0xf]
    %v87 = vld [vmem:[#allocation6 + $0x3c] sm:$0xf]
    %v88 = vld [vmem:[%s2] sm:$0x1]
    %v90 = vlaneseq
    %v91 = vshrl.u32 %v90, 7
    %v92 = vsub.s32 0, %v91
    %v93 = vrot.slane %v88, %v92
    %v97 = vunpack.c.l.b16 %v70
    %v98 = vunpack.c.l.b16 %v71
    %v99 = vpack.c.b16 %v98, %v97
    %v117 = vunpack.c.l.b16 %v72
    %v118 = vunpack.c.l.b16 %v73
    %v119 = vunpack.c.l.b16 %v74
    %v120 = vunpack.c.l.b16 %v75
    %v121 = vunpack.c.l.b16 %v76
    %v122 = vunpack.c.l.b16 %v77
    %v123 = vunpack.c.l.b16 %v78
    %v124 = vunpack.c.l.b16 %v79
    %v125 = vunpack.c.l.b16 %v80
    %v126 = vunpack.c.l.b16 %v81
    %v127 = vunpack.c.l.b16 %v82
    %v128 = vunpack.c.l.b16 %v83
    %v129 = vunpack.c.l.b16 %v84
    %v130 = vunpack.c.l.b16 %v85
    %v131 = vunpack.c.l.b16 %v86
    %v132 = vunpack.c.l.b16 %v87
    %v133 = vpack.c.b16 %v118, %v117
    %v134 = vpack.c.b16 %v120, %v119
    %v135 = vpack.c.b16 %v122, %v121
    %v136 = vpack.c.b16 %v124, %v123
    %v137 = vpack.c.b16 %v126, %v125
    %v138 = vpack.c.b16 %v128, %v127
    %v139 = vpack.c.b16 %v130, %v129
    %v140 = vpack.c.b16 %v132, %v131
    %149 = vmatprep.subr.bf16.mxu0 0
    %150 = vmatpush1.bf16.msra.mxu0 %v133
    %151 = vmatprep.subr.bf16.mxu0 0
    %152 = vmatpush1.bf16.msra.mxu0 %v134
    %153 = vmatprep.subr.bf16.mxu0 0
    %154 = vmatpush1.bf16.msra.mxu0 %v135
    %155 = vmatprep.subr.bf16.mxu0 0
    %156 = vmatpush1.bf16.msra.mxu0 %v136
    %157 = vmatprep.subr.bf16.mxu0 0
    %158 = vmatpush1.bf16.msra.mxu0 %v137
    %159 = vmatprep.subr.bf16.mxu0 0
    %160 = vmatpush1.bf16.msra.mxu0 %v138
    %161 = vmatprep.subr.bf16.mxu0 0
    %162 = vmatpush1.bf16.msra.mxu0 %v139
    %163 = vmatprep.subr.bf16.mxu0 0
    %164 = vmatpush1.bf16.msra.mxu0 %v140
    %165 = vmatprep.subr.bf16.mxu0 0
    %166 = vmatpush1.bf16.msra.mxu0 0
    %167 = vmatprep.subr.bf16.mxu0 0
    %168 = vmatpush1.bf16.msra.mxu0 0
    %169 = vmatprep.subr.bf16.mxu0 0
    %170 = vmatpush1.bf16.msra.mxu0 0
    %171 = vmatprep.subr.bf16.mxu0 0
    %172 = vmatpush1.bf16.msra.mxu0 0
    %173 = vmatprep.subr.bf16.mxu0 0
    %174 = vmatpush1.bf16.msra.mxu0 0
    %175 = vmatprep.subr.bf16.mxu0 0
    %176 = vmatpush1.bf16.msra.mxu0 0
    %177 = vmatprep.subr.bf16.mxu0 0
    %178 = vmatpush1.bf16.msra.mxu0 0
    %179 = vmatprep.subr.bf16.mxu0 0
    %180 = vmatpush1.bf16.msra.mxu0 0
    %181 = vmatprep.mubr.bf16.mxu0 0
    %182 = vmatmul.mubr.bf16.gmra.mrb[0].mxu0 %v99
    %v183 = vpop.f32.mrb[0].mxu0
    %v184 = vadd.f32 %v93, %v183
    %v185 = vpop.f32.mrb[0].mxu0
    %v186 = vpop.f32.mrb[0].mxu0
    %v187 = vadd.f32 %v93, %v186
    %v188 = vpop.f32.mrb[0].mxu0
    %189 = vdwg.mxu0
    %v190 = vmax.f32 %v184, 0.0
    %v191 = vmax.f32 %v187, 0.0
    %v192 = vpack.c.bf16 %v191, %v190
    %v193 = vld [vmem:[#allocation8] sm:$0xf]
    %v194 = vld [vmem:[#allocation8 + $0x4] sm:$0xf]
    %v195 = vld [vmem:[#allocation8 + $0x8] sm:$0xf]
    %v196 = vld [vmem:[#allocation8 + $0xc] sm:$0xf]
    %v197 = vld [vmem:[#allocation8 + $0x10] sm:$0xf]
    %v198 = vld [vmem:[#allocation8 + $0x14] sm:$0xf]
    %v199 = vld [vmem:[#allocation8 + $0x18] sm:$0xf]
    %v200 = vld [vmem:[#allocation8 + $0x1c] sm:$0xf]
    %v201 = vld [vmem:[#allocation8 + $0x20] sm:$0xf]
    %v202 = vld [vmem:[#allocation8 + $0x24] sm:$0xf]
    %v203 = vld [vmem:[#allocation8 + $0x28] sm:$0xf]
    %v204 = vld [vmem:[#allocation8 + $0x2c] sm:$0xf]
    %v205 = vld [vmem:[#allocation8 + $0x30] sm:$0xf]
    %v206 = vld [vmem:[#allocation8 + $0x34] sm:$0xf]
    %v207 = vld [vmem:[#allocation8 + $0x38] sm:$0xf]
    %v208 = vld [vmem:[#allocation8 + $0x3c] sm:$0xf]
    %v209 = vld [vmem:[%s4] sm:$0x1]
    %v211 = vlaneseq
    %v212 = vshrl.u32 %v211, 7
    %v213 = vsub.s32 0, %v212
    %v214 = vrot.slane %v209, %v213
    %v232 = vunpack.c.l.b16 %v193
    %v233 = vunpack.c.l.b16 %v194
    %v234 = vunpack.c.l.b16 %v195
    %v235 = vunpack.c.l.b16 %v196
    %v236 = vunpack.c.l.b16 %v197
    %v237 = vunpack.c.l.b16 %v198
    %v238 = vunpack.c.l.b16 %v199
    %v239 = vunpack.c.l.b16 %v200
    %v240 = vunpack.c.l.b16 %v201
    %v241 = vunpack.c.l.b16 %v202
    %v242 = vunpack.c.l.b16 %v203
    %v243 = vunpack.c.l.b16 %v204
    %v244 = vunpack.c.l.b16 %v205
    %v245 = vunpack.c.l.b16 %v206
    %v246 = vunpack.c.l.b16 %v207
    %v247 = vunpack.c.l.b16 %v208
    %v248 = vpack.c.b16 %v233, %v232
    %v249 = vpack.c.b16 %v235, %v234
    %v250 = vpack.c.b16 %v237, %v236
    %v251 = vpack.c.b16 %v239, %v238
    %v252 = vpack.c.b16 %v241, %v240
    %v253 = vpack.c.b16 %v243, %v242
    %v254 = vpack.c.b16 %v245, %v244
    %v255 = vpack.c.b16 %v247, %v246
    %264 = vmatprep.subr.bf16.mxu0 0
    %265 = vmatpush1.bf16.msra.mxu0 %v248
    %266 = vmatprep.subr.bf16.mxu0 0
    %267 = vmatpush1.bf16.msra.mxu0 %v249
    %268 = vmatprep.subr.bf16.mxu0 0
    %269 = vmatpush1.bf16.msra.mxu0 %v250
    %270 = vmatprep.subr.bf16.mxu0 0
    %271 = vmatpush1.bf16.msra.mxu0 %v251
    %272 = vmatprep.subr.bf16.mxu0 0
    %273 = vmatpush1.bf16.msra.mxu0 %v252
    %274 = vmatprep.subr.bf16.mxu0 0
    %275 = vmatpush1.bf16.msra.mxu0 %v253
    %276 = vmatprep.subr.bf16.mxu0 0
    %277 = vmatpush1.bf16.msra.mxu0 %v254
    %278 = vmatprep.subr.bf16.mxu0 0
    %279 = vmatpush1.bf16.msra.mxu0 %v255
    %280 = vmatprep.subr.bf16.mxu0 0
    %281 = vmatpush1.bf16.msra.mxu0 0
    %282 = vmatprep.subr.bf16.mxu0 0
    %283 = vmatpush1.bf16.msra.mxu0 0
    %284 = vmatprep.subr.bf16.mxu0 0
    %285 = vmatpush1.bf16.msra.mxu0 0
    %286 = vmatprep.subr.bf16.mxu0 0
    %287 = vmatpush1.bf16.msra.mxu0 0
    %288 = vmatprep.subr.bf16.mxu0 0
    %289 = vmatpush1.bf16.msra.mxu0 0
    %290 = vmatprep.subr.bf16.mxu0 0
    %291 = vmatpush1.bf16.msra.mxu0 0
    %292 = vmatprep.subr.bf16.mxu0 0
    %293 = vmatpush1.bf16.msra.mxu0 0
    %294 = vmatprep.subr.bf16.mxu0 0
    %295 = vmatpush1.bf16.msra.mxu0 0
    %296 = vmatprep.mubr.bf16.mxu0 0
    %297 = vmatmul.mubr.bf16.gmra.mrb[0].mxu0 %v192
    %v298 = vpop.f32.mrb[0].mxu0
    %v299 = vadd.f32 %v214, %v298
    %v300 = vpop.f32.mrb[0].mxu0
    %v301 = vpop.f32.mrb[0].mxu0
    %v302 = vadd.f32 %v214, %v301
    %v303 = vpop.f32.mrb[0].mxu0
    %304 = vdwg.mxu0
    %v305 = vmax.f32 %v299, 0.0
    %v306 = vmax.f32 %v302, 0.0
    %v307 = vld [vmem:[%s5] sm:$0x1]
    %v309 = vlaneseq
    %v310 = vshrl.u32 %v309, 7
    %v311 = vsub.s32 0, %v310
    %v312 = vrot.slane %v307, %v311
    %v314 = vmul.f32 %v305, %v312
    %v315 = vmul.f32 %v306, %v312
    %316 = vadd.xlane.f32.xlu0 %v314
    %v317 = vpop.xlane.xlu0 %316
    %318 = vadd.xlane.f32.xlu0 %v315
    %v319 = vpop.xlane.xlu0 %318
    %s320 = sld [smem:[#allocation2]]
    %v321 = vstv %s320
    %v322 = vadd.f32 %v317, %v321
    %v323 = vadd.f32 %v319, %v321
    %324 = vxpose.xlu0.b32.start [1/16] %v322, 128
    %325 = vxpose.xlu0.b32.cont [2/16] %v323, 128
    %326 = vxpose.xlu0.b32.cont [3/16] 0.0, 128
    %327 = vxpose.xlu0.b32.cont [4/16] 0.0, 128
    %328 = vxpose.xlu0.b32.cont [5/16] 0.0, 128
    %329 = vxpose.xlu0.b32.cont [6/16] 0.0, 128
    %330 = vxpose.xlu0.b32.cont [7/16] 0.0, 128
    %331 = vxpose.xlu0.b32.cont [8/16] 0.0, 128
    %332 = vxpose.xlu0.b32.cont [9/16] 0.0, 128
    %333 = vxpose.xlu0.b32.cont [10/16] 0.0, 128
    %334 = vxpose.xlu0.b32.cont [11/16] 0.0, 128
    %335 = vxpose.xlu0.b32.cont [12/16] 0.0, 128
    %336 = vxpose.xlu0.b32.cont [13/16] 0.0, 128
    %337 = vxpose.xlu0.b32.cont [14/16] 0.0, 128
    %338 = vxpose.xlu0.b32.cont [15/16] 0.0, 128
    %339 = vxpose.xlu0.b32.end [16/16] 0.0, 128
    %v340 = vpop.trf.xlu0
    %v341 = vpop.trf.xlu0
    %v342 = vpop.trf.xlu0
    %v343 = vpop.trf.xlu0
    %v344 = vpop.trf.xlu0
    %v345 = vpop.trf.xlu0
    %v346 = vpop.trf.xlu0
    %v347 = vpop.trf.xlu0
    %v348 = vpop.trf.xlu0
    %v349 = vpop.trf.xlu0
    %v350 = vpop.trf.xlu0
    %v351 = vpop.trf.xlu0
    %v352 = vpop.trf.xlu0
    %v353 = vpop.trf.xlu0
    %v354 = vpop.trf.xlu0
    %v355 = vpop.trf.xlu0
    %v356 = vxor.u32 %v340, 2147483648
    %v357 = vmul.f32 %v356, 1.442695
    %v358 = vpow.pop %v357
    %v359 = vadd.f32 %v358, 1.0
    %v360 = vrcp.pop %v359
    %v361 = vmul.f32 1.0, %v360
    %vm362 = vcmask 122880
    %363 = vst.msk [vmem:[#allocation9] sm:$0x1] %vm362, %v361
    // Predicated region
    $region42: #{tpu_custom_call.1} parent=1 // pred_check
      _
    $region43: #{tpu_custom_call.1} parent=1 // pred_check_branch
      %365 = sbr.rel (0) target = $region45
    $region44: #{tpu_custom_call.1} parent=1 // pred_region
      %s367 = ssub.s32 16, 16
      %368 = vsyncadd [#allocation5], %s367
      %s370 = sshll.u32 [#allocation9], 4
      %s371 = int_to_ptr.vmem [resolvable:$true] %s370
      %373 = dma.vmem_to_hbm [thread:$0]  %s371, 16, %s7, [#allocation5]
    $region45: #{tpu_custom_call.1} parent=1 // pred_fallthru
      _
    // Predicated region
    $region46: #{tpu_custom_call.1} parent=1 // pred_check
      _
    $region47: #{tpu_custom_call.1} parent=1 // pred_check_branch
      %375 = sbr.rel (0) target = $region49
    $region48: #{tpu_custom_call.1} parent=1 // pred_region
      %376 = dma.done [#allocation5], 16
    $region49: #{tpu_custom_call.1} parent=1 // pred_fallthru
      _
    %377 = vsyncpa [#allocation4], 1
    %378 = vsyncpa [#allocation7], 1
    %379 = vsyncpa [#allocation5], 1

</llo_original>
